<compile_context>
chip_gen: v5e
topology: v5e:2x2
jax: 0.10.0
libtpu: 0.0.40
codegen_flags: <defaults>
</compile_context>

<pallas_src>
import jax
import jax.numpy as jnp
from jax.experimental import pallas as pl
from jax.experimental.pallas import tpu as pltpu  # noqa: F401  (TPU backend assumed)

BATCH = 2
IN_F = 2
OUT_F = 2
OUT_ROWS = 2 * BATCH              # rows after torch.cat([y, y], dim=0)
PACK_ROWS = OUT_ROWS + IN_F + 1   # [x ; x] (4) + W^T (2) + (b + 10) (1) = 7


def linear_cat_add_kernel(p_ref, o_ref):
    # p_ref: (PACK_ROWS, OUT_F) packed in the wrapper as
    #   rows [0, 4) : x duplicated  (the "cat" already materialized, fused in the wrapper)
    #   rows [4, 6) : W^T
    #   row   6     : b + 10
    xcat = p_ref[0:OUT_ROWS, :]                                # (4, 2)

    # 2-term contraction unrolled as broadcast multiply-adds on the VPU;
    # bias and the +10 are already folded into the last packed row.
    y = (xcat[:, 0:1] * p_ref[OUT_ROWS:OUT_ROWS + 1, :]
         + xcat[:, 1:2] * p_ref[OUT_ROWS + 1:OUT_ROWS + 2, :]
         + p_ref[OUT_ROWS + 2:OUT_ROWS + 3, :])                # (4, 2)

    # Single unmasked full-tile store of the whole output block.
    o_ref[...] = y.astype(o_ref.dtype)


@jax.jit
def model_forward(x, w, b):
    # Pack everything into ONE input tile so the kernel does 1 input DMA + 1 output DMA.
    # Under jit the transpose / add / concat fuse into a single cached fusion.
    packed = jnp.concatenate(
        [x, x, w.T, (b + 10.0).reshape(1, OUT_F)], axis=0)     # (PACK_ROWS, OUT_F)

    bytes_accessed = 4 * (PACK_ROWS * OUT_F + OUT_ROWS * OUT_F)
    return pl.pallas_call(
        linear_cat_add_kernel,
        out_shape=jax.ShapeDtypeStruct((OUT_ROWS, OUT_F), jnp.float32),
        in_specs=[
            pl.BlockSpec((PACK_ROWS, OUT_F), lambda: (0, 0)),  # block == full array dims
        ],
        out_specs=pl.BlockSpec((OUT_ROWS, OUT_F), lambda: (0, 0)),
        cost_estimate=pl.CostEstimate(
            flops=2 * OUT_ROWS * IN_F * OUT_F + OUT_ROWS * OUT_F,  # FMAs + bias/+10 add
            transcendentals=0,
            bytes_accessed=bytes_accessed,
        ),
    )(packed)


if __name__ == "__main__":
    key = jax.random.PRNGKey(0)
    kx, kw, kb = jax.random.split(key, 3)

    # Input, matching torch.randn(2, 2)
    x = jax.random.normal(kx, (BATCH, IN_F), dtype=jnp.float32)

    # Deterministic Linear(2, 2) parameters (PyTorch-default-like uniform init range)
    bound = 1.0 / jnp.sqrt(IN_F)
    w = jax.random.uniform(kw, (OUT_F, IN_F), minval=-bound, maxval=bound,
                           dtype=jnp.float32)
    b = jax.random.uniform(kb, (OUT_F,), minval=-bound, maxval=bound,
                           dtype=jnp.float32)

    out = model_forward(x, w, b)
    out = jax.block_until_ready(out)

    # Pure-JAX reference check
    y_ref = x @ w.T + b
    ref = jnp.concatenate([y_ref, y_ref], axis=0) + 10.0
    assert out.shape == (OUT_ROWS, OUT_F)
    assert jnp.allclose(out, ref, atol=1e-5, rtol=1e-5)

    print("KERNEL_OK")
</pallas_src>

<mosaic_0001>
module attributes {stable_mosaic.version = 11 : i64} {
  func.func @linear_cat_add_kernel(%arg0: memref<7x2xf32, #tpu.memory_space<vmem>>, %arg1: memref<4x2xf32, #tpu.memory_space<vmem>>) attributes {dimension_semantics = [], scalar_prefetch = 0 : i64, scratch_operands = 0 : i64, tpu.core_type = #tpu.core_type<tc>} {
    %c0 = arith.constant 0 : index
    %c0_0 = arith.constant 0 : index
    %0 = vector.load %arg0[%c0, %c0_0] : memref<7x2xf32, #tpu.memory_space<vmem>>, vector<4x2xf32>
    %1 = vector.extract_strided_slice %0 {offsets = [0, 0], sizes = [4, 1], strides = [1, 1]} : vector<4x2xf32> to vector<4x1xf32>
    %c4 = arith.constant 4 : index
    %c0_1 = arith.constant 0 : index
    %2 = vector.load %arg0[%c4, %c0_1] : memref<7x2xf32, #tpu.memory_space<vmem>>, vector<1x2xf32>
    %3 = vector.broadcast %1 : vector<4x1xf32> to vector<4x2xf32>
    %4 = vector.broadcast %2 : vector<1x2xf32> to vector<4x2xf32>
    %5 = arith.mulf %3, %4 : vector<4x2xf32>
    %6 = vector.extract_strided_slice %0 {offsets = [0, 1], sizes = [4, 1], strides = [1, 1]} : vector<4x2xf32> to vector<4x1xf32>
    %c5 = arith.constant 5 : index
    %c0_2 = arith.constant 0 : index
    %7 = vector.load %arg0[%c5, %c0_2] : memref<7x2xf32, #tpu.memory_space<vmem>>, vector<1x2xf32>
    %8 = vector.broadcast %6 : vector<4x1xf32> to vector<4x2xf32>
    %9 = vector.broadcast %7 : vector<1x2xf32> to vector<4x2xf32>
    %10 = arith.mulf %8, %9 : vector<4x2xf32>
    %11 = arith.addf %5, %10 : vector<4x2xf32>
    %c6 = arith.constant 6 : index
    %c0_3 = arith.constant 0 : index
    %12 = vector.load %arg0[%c6, %c0_3] : memref<7x2xf32, #tpu.memory_space<vmem>>, vector<1x2xf32>
    %13 = vector.broadcast %12 : vector<1x2xf32> to vector<4x2xf32>
    %14 = arith.addf %11, %13 : vector<4x2xf32>
    %c0_4 = arith.constant 0 : index
    %c0_5 = arith.constant 0 : index
    %15 = vector.load %arg1[%c0_4, %c0_5] : memref<4x2xf32, #tpu.memory_space<vmem>>, vector<4x2xf32>
    tpu.vector_store %arg1[%c0_4, %c0_5], %14 {strides = array<i32>} : memref<4x2xf32, #tpu.memory_space<vmem>>, vector<4x2xf32>,
    return
  }
}

</mosaic_0001>

<llo_original>
// kernel: model_forward.1
$region0: #{model_forward.1}
  #allocation0 [shape = 'u32[]', space=smem, size = 0x4, offset = 0x4, fixed_abs, tag = 'smem constant byte address 0x4 - core index']
  #allocation1 [shape = 'u32[72,128]{1,0:T(1,128)}', space=vmem, size = 0x9000, scoped, tag = 'internal scratch']
  %s0 = inlined_call_operand.vmem [shape: f32[7,2], index: 0, kind: input, shape index: {}]
  %s1 = inlined_call_operand.vmem [shape: f32[4,2], index: 1, kind: output, shape index: {}]
  %s2 = sld [smem:[#allocation0]]
  $region14: #{model_forward.1} parent=0
    _
  %s4 = ssub.s32 1, %s2
  %s5 = scalar_select 0, %s4, %s2
  // Predicated region
  $region2: #{model_forward.1} parent=0 // pred_check
    _
  $region3: #{model_forward.1} parent=0 // pred_check_branch
    %7 = sbr.rel (0) target = $region5
  $region4: #{model_forward.1} parent=0 // pred_region
    _
  $region5: #{model_forward.1} parent=0 // pred_fallthru
    _
  %v8 = vld [vmem:[%s0] sm:$0xf]
  %v9 = vld [vmem:[%s0 + $0x4] sm:$0x1]
  %11 = vset.pattern.permute.xlu0 0
  %12 = vperm.xlu0 %11, %v8
  %v13 = vpop.permute.xlu0 %12
  %v15 = vperm.slane %v9, 0
  %v16 = vmul.f32 %v13, %v15
  %v17 = vld [vmem:[%s0 + $0x5] sm:$0x1]
  %18 = vset.pattern.permute.xlu0 1
  %19 = vperm.xlu0 %18, %v8
  %v20 = vpop.permute.xlu0 %19
  %v22 = vperm.slane %v17, 0
  %v23 = vmul.f32 %v20, %v22
  %v24 = vadd.f32 %v16, %v23
  %v25 = vld [vmem:[%s0 + $0x6] sm:$0x1]
  %v26 = vperm.slane %v25, 0
  %v27 = vadd.f32 %v24, %v26
  %vm28 = vcmask 11264
  %29 = vst.msk [vmem:[%s1] sm:$0xf] %vm28, %v27
  // Predicated region
  $region6: #{model_forward.1} parent=0 // pred_check
    _
  $region7: #{model_forward.1} parent=0 // pred_check_branch
    %31 = sbr.rel (0) target = $region9
  $region8: #{model_forward.1} parent=0 // pred_region
    _
  $region9: #{model_forward.1} parent=0 // pred_fallthru
    _
  // Predicated region
  $region10: #{model_forward.1} parent=0 // pred_check
    _
  $region11: #{model_forward.1} parent=0 // pred_check_branch
    %33 = sbr.rel (0) target = $region13
  $region12: #{model_forward.1} parent=0 // pred_region
    _
  $region13: #{model_forward.1} parent=0 // pred_fallthru
    _

</llo_original>
